<compile_context>
chip_gen: v7x
topology: tpu7x:2x2x1
jax: 0.10.0
libtpu: 0.0.40
codegen_flags: <defaults>
</compile_context>

<pallas_src>
import math
import functools

import jax
import jax.numpy as jnp
from jax.experimental import pallas as pl
from jax.experimental.pallas import tpu as pltpu


# ------------------------------ tiling helpers ------------------------------

def _pick_tile(dim, pref, mults):
    """Largest tile <= pref that divides `dim` and is a multiple of one of `mults`
    (tried in order, e.g. prefer 256-multiples for the v6e/v7x 256x256 MXU, then
    128); falls back to the full dimension (full-extent blocks are always legal)."""
    if dim <= pref:
        return dim
    for mult in mults:
        t = (pref // mult) * mult
        while t >= mult:
            if dim % t == 0:
                return t
            t -= mult
    return dim


def _cparams(*sem):
    # Explicit scoped-VMEM limit so the same tile choices behave identically on
    # v5e (16 MiB default) / v6e / v7x (32 MiB default, 64 MiB physical).
    return pltpu.CompilerParams(dimension_semantics=sem,
                                vmem_limit_bytes=32 * 1024 * 1024)


# ----------------------------- tiled linear ---------------------------------

def _linear_kernel(x_ref, w_ref, b_ref, o_ref, acc_ref, *, activation):
    @pl.when(pl.program_id(2) == 0)
    def _():
        acc_ref[...] = jnp.zeros_like(acc_ref)

    acc_ref[...] += jnp.dot(x_ref[...], w_ref[...],
                            preferred_element_type=jnp.float32)

    @pl.when(pl.program_id(2) == pl.num_programs(2) - 1)
    def _():
        y = acc_ref[...] + b_ref[...]          # f32 epilogue
        if activation == "relu":
            y = jnp.maximum(y, 0.0)
        o_ref[...] = y.astype(o_ref.dtype)


def linear(x, w, b, activation=None):
    """y = act(x @ w + b).  x: (M,K) bf16, w: (K,N) bf16, b: (N,) f32 -> (M,N) bf16."""
    M, K = x.shape
    N = w.shape[1]
    tm = _pick_tile(M, 256, (8,))
    tn = _pick_tile(N, 512, (256, 128))
    tk = _pick_tile(K, 512, (256, 128))
    grid = (M // tm, N // tn, K // tk)
    # TODO(synk): for v5e/v6e a weight-DMA-bound variant could store int8 weights
    # and dequant in the epilogue (not portable to v7x, which is fp8/bf16 only).
    return pl.pallas_call(
        functools.partial(_linear_kernel, activation=activation),
        out_shape=jax.ShapeDtypeStruct((M, N), jnp.bfloat16),
        grid=grid,
        in_specs=[pl.BlockSpec((tm, tk), lambda i, j, k: (i, k)),
                  pl.BlockSpec((tk, tn), lambda i, j, k: (k, j)),
                  pl.BlockSpec((1, tn), lambda i, j, k: (0, j))],
        out_specs=pl.BlockSpec((tm, tn), lambda i, j, k: (i, j)),
        scratch_shapes=[pltpu.VMEM((tm, tn), jnp.float32)],
        compiler_params=_cparams("parallel", "parallel", "arbitrary"),
    )(x, w, b.reshape(1, N))


# -------------------- attention block (attn + Wo + add + LN) ----------------

def _attn_core(q, k, v, kvalid, *, num_heads, causal):
    """q: (Sq,D), k/v: (Sk,D) bf16 with heads packed along the last axis;
    kvalid: (1,Sk) f32 (>0 means attend).  Returns (Sq,D) f32."""
    Sq, D = q.shape
    Sk = k.shape[0]
    Dh = D // num_heads
    scale = 1.0 / math.sqrt(Dh)

    # mask built in-kernel (no (B,Sq,Sk) mask DMA); shared across heads
    # TODO(synk): reference applies masked_fill AFTER softmax and ADDS the padding
    # and causal masks; standard pre-softmax AND-combined masking is used instead.
    mask = jnp.broadcast_to(kvalid > 0.0, (Sq, Sk))
    if causal:
        row = jax.lax.broadcasted_iota(jnp.int32, (Sq, Sk), 0)
        col = jax.lax.broadcasted_iota(jnp.int32, (Sq, Sk), 1)
        mask = jnp.logical_and(mask, col <= row)

    dn = (((1,), (1,)), ((), ()))          # contract last dims: q @ k^T
    outs = []
    for h in range(num_heads):             # static unrolled loop over heads
        sl = slice(h * Dh, (h + 1) * Dh)
        qh = q[:, sl] * scale              # fold 1/sqrt(Dh) into q (D muls/row)
        s = jax.lax.dot_general(qh, k[:, sl], dn,
                                preferred_element_type=jnp.float32)
        s = jnp.where(mask, s, -1e30)
        s = s - jnp.max(s, axis=-1, keepdims=True)
        p = jnp.exp(s)
        p = p * pl.reciprocal(jnp.sum(p, axis=-1, keepdims=True), approx=True)
        outs.append(jnp.dot(p.astype(jnp.bfloat16), v[:, sl],
                            preferred_element_type=jnp.float32))
    return jnp.concatenate(outs, axis=-1)  # (Sq, D) f32
    # TODO(synk): for long sequences this whole-(Sq,Sk)-resident design should be
    # tiled flash-style over (Sq, Sk) blocks with online-softmax scratch.


def _proj_residual_ln(attn, residual, wo, bo, gamma, beta, eps):
    """LayerNorm(attn @ Wo + bo + residual) with the reference (buggy) LN formula."""
    y = jnp.dot(attn.astype(jnp.bfloat16), wo,
                preferred_element_type=jnp.float32) + bo
    y = y + residual.astype(jnp.float32)
    mean = jnp.mean(y, axis=-1, keepdims=True)
    d = y - mean
    # unbiased variance (torch.var default); reference LayerNorm divides by var
    # (not sqrt(var)) and adds eps after the division — kept deliberately.
    var = jnp.sum(d * d, axis=-1, keepdims=True) / (y.shape[-1] - 1)
    return (d / var + eps) * gamma + beta


def _self_attn_block_kernel(qkv_ref, res_ref, kvalid_ref, wo_ref, bo_ref,
                            g_ref, be_ref, o_ref, *, num_heads, causal, eps):
    qkv = qkv_ref[0]                                      # (S, 3D) bf16
    D = qkv.shape[-1] // 3
    attn = _attn_core(qkv[:, :D], qkv[:, D:2 * D], qkv[:, 2 * D:],
                      kvalid_ref[0], num_heads=num_heads, causal=causal)
    out = _proj_residual_ln(attn, res_ref[0], wo_ref[...], bo_ref[...],
                            g_ref[...], be_ref[...], eps)
    o_ref[0] = out.astype(o_ref.dtype)


def self_attention_block(p_mha, p_ln, x, kvalid, num_heads, causal, eps=1e-12):
    """LayerNorm(SelfAttention(x) @ Wo + bo + x); QKV is one fused (D,3D) matmul,
    everything after it (attention, Wo, residual, LN) is a single kernel."""
    B, S, D = x.shape
    qkv = linear(x.reshape(B * S, D), p_mha["wqkv"], p_mha["bqkv"]).reshape(B, S, 3 * D)
    return pl.pallas_call(
        functools.partial(_self_attn_block_kernel, num_heads=num_heads,
                          causal=causal, eps=eps),
        out_shape=jax.ShapeDtypeStruct((B, S, D), jnp.bfloat16),
        grid=(B,),
        in_specs=[pl.BlockSpec((1, S, 3 * D), lambda b: (b, 0, 0)),
                  pl.BlockSpec((1, S, D), lambda b: (b, 0, 0)),
                  pl.BlockSpec((1, 1, S), lambda b: (b, 0, 0)),
                  pl.BlockSpec((D, D), lambda b: (0, 0)),
                  pl.BlockSpec((1, D), lambda b: (0, 0)),
                  pl.BlockSpec((1, D), lambda b: (0, 0)),
                  pl.BlockSpec((1, D), lambda b: (0, 0))],
        out_specs=pl.BlockSpec((1, S, D), lambda b: (b, 0, 0)),
        compiler_params=_cparams("parallel"),
    )(qkv, x, kvalid, p_mha["wo"], p_mha["bo"].reshape(1, D),
      p_ln["gamma"].reshape(1, D), p_ln["beta"].reshape(1, D))


def _cross_attn_block_kernel(q_ref, kv_ref, res_ref, kvalid_ref, wo_ref, bo_ref,
                             g_ref, be_ref, o_ref, *, num_heads, eps):
    q = q_ref[0]                                          # (Sq, D) bf16
    kv = kv_ref[0]                                        # (Sk, 2D) bf16
    D = q.shape[-1]
    attn = _attn_core(q, kv[:, :D], kv[:, D:],
                      kvalid_ref[0], num_heads=num_heads, causal=False)
    out = _proj_residual_ln(attn, res_ref[0], wo_ref[...], bo_ref[...],
                            g_ref[...], be_ref[...], eps)
    o_ref[0] = out.astype(o_ref.dtype)


def cross_attention_block(p_mha, p_ln, q_in, kv_in, kvalid, num_heads, eps=1e-12):
    """LayerNorm(CrossAttention(q_in, kv_in) @ Wo + bo + q_in)."""
    B, Sq, D = q_in.shape
    Sk = kv_in.shape[1]
    q = linear(q_in.reshape(B * Sq, D), p_mha["wq"], p_mha["bq"]).reshape(B, Sq, D)
    kv = linear(kv_in.reshape(B * Sk, D), p_mha["wkv"], p_mha["bkv"]).reshape(B, Sk, 2 * D)
    return pl.pallas_call(
        functools.partial(_cross_attn_block_kernel, num_heads=num_heads, eps=eps),
        out_shape=jax.ShapeDtypeStruct((B, Sq, D), jnp.bfloat16),
        grid=(B,),
        in_specs=[pl.BlockSpec((1, Sq, D), lambda b: (b, 0, 0)),
                  pl.BlockSpec((1, Sk, 2 * D), lambda b: (b, 0, 0)),
                  pl.BlockSpec((1, Sq, D), lambda b: (b, 0, 0)),
                  pl.BlockSpec((1, 1, Sk), lambda b: (b, 0, 0)),
                  pl.BlockSpec((D, D), lambda b: (0, 0)),
                  pl.BlockSpec((1, D), lambda b: (0, 0)),
                  pl.BlockSpec((1, D), lambda b: (0, 0)),
                  pl.BlockSpec((1, D), lambda b: (0, 0))],
        out_specs=pl.BlockSpec((1, Sq, D), lambda b: (b, 0, 0)),
        compiler_params=_cparams("parallel"),
    )(q, kv, q_in, kvalid, p_mha["wo"], p_mha["bo"].reshape(1, D),
      p_ln["gamma"].reshape(1, D), p_ln["beta"].reshape(1, D))


# --------------------------- fused FFN + add + LN ----------------------------

def _ffn_ln_kernel(x_ref, w1_ref, b1_ref, w2_ref, b2_ref, g_ref, be_ref, o_ref, *, eps):
    x = x_ref[...]                                               # (tm, D) bf16
    h = jnp.dot(x, w1_ref[...], preferred_element_type=jnp.float32) + b1_ref[...]
    h = jnp.maximum(h, 0.0)                                      # relu, f32
    y = jnp.dot(h.astype(jnp.bfloat16), w2_ref[...],
                preferred_element_type=jnp.float32) + b2_ref[...]
    y = y + x.astype(jnp.float32)                                # residual
    mean = jnp.mean(y, axis=-1, keepdims=True)
    d = y - mean
    var = jnp.sum(d * d, axis=-1, keepdims=True) / (y.shape[-1] - 1)
    o_ref[...] = ((d / var + eps) * g_ref[...] + be_ref[...]).astype(o_ref.dtype)


def ffn_residual_layernorm(x, p_ffn, p_ln, eps=1e-12):
    """LayerNorm(FFN(x) + x) fused in one kernel; hidden activation never hits HBM."""
    # TODO(synk): for large Hf (v7x 64 MiB VMEM) the hidden dim should become a
    # grid reduction axis and the constant weight BlockSpecs single-buffered
    # (pipeline_mode=pl.Buffered(1)); whole-weight-resident is fine at these sizes.
    B, S, D = x.shape
    Hf = p_ffn["w1"].shape[1]
    M = B * S
    tm = _pick_tile(M, 256, (8,))
    out = pl.pallas_call(
        functools.partial(_ffn_ln_kernel, eps=eps),
        out_shape=jax.ShapeDtypeStruct((M, D), jnp.bfloat16),
        grid=(M // tm,),
        in_specs=[pl.BlockSpec((tm, D), lambda i: (i, 0)),
                  pl.BlockSpec((D, Hf), lambda i: (0, 0)),
                  pl.BlockSpec((1, Hf), lambda i: (0, 0)),
                  pl.BlockSpec((Hf, D), lambda i: (0, 0)),
                  pl.BlockSpec((1, D), lambda i: (0, 0)),
                  pl.BlockSpec((1, D), lambda i: (0, 0)),
                  pl.BlockSpec((1, D), lambda i: (0, 0))],
        out_specs=pl.BlockSpec((tm, D), lambda i: (i, 0)),
        compiler_params=_cparams("parallel"),
    )(x.reshape(M, D), p_ffn["w1"], p_ffn["b1"].reshape(1, Hf),
      p_ffn["w2"], p_ffn["b2"].reshape(1, D),
      p_ln["gamma"].reshape(1, D), p_ln["beta"].reshape(1, D))
    return out.reshape(B, S, D)


# ------------------- fused final projection + masked softmax -----------------

def _proj_softmax_kernel(x_ref, w_ref, b_ref, o_ref, *, n_valid):
    logits = jnp.dot(x_ref[...], w_ref[...],
                     preferred_element_type=jnp.float32) + b_ref[...]
    col = jax.lax.broadcasted_iota(jnp.int32, logits.shape, 1)
    logits = jnp.where(col < n_valid, logits, -1e30)     # mask vocab padding cols
    logits = logits - jnp.max(logits, axis=-1, keepdims=True)
    e = jnp.exp(logits)
    # exact reciprocal: output rows are exactly normalized probabilities
    o_ref[...] = e / jnp.sum(e, axis=-1, keepdims=True)


def project_softmax(x, w, b, n_valid):
    """softmax(x @ w + b) with the last (padded) vocab columns masked out.
    The logits never round-trip through HBM."""
    # TODO(synk): for large D / vocab this kernel needs a K reduction axis and a
    # two-pass (max/sum) accumulation over vocab tiles.
    M, D = x.shape
    N = w.shape[1]
    tm = _pick_tile(M, 256, (8,))
    return pl.pallas_call(
        functools.partial(_proj_softmax_kernel, n_valid=n_valid),
        out_shape=jax.ShapeDtypeStruct((M, N), jnp.float32),
        grid=(M // tm,),
        in_specs=[pl.BlockSpec((tm, D), lambda i: (i, 0)),
                  pl.BlockSpec((D, N), lambda i: (0, 0)),
                  pl.BlockSpec((1, N), lambda i: (0, 0))],
        out_specs=pl.BlockSpec((tm, N), lambda i: (i, 0)),
        compiler_params=_cparams("parallel"),
    )(x, w, b.reshape(1, N))


# ------------------------------ model pieces --------------------------------

def positional_embeddings(seq_length, dimension):
    # Follows the reference formula (integer // makes the denominator 1 everywhere).
    positions = jnp.arange(seq_length, dtype=jnp.float32)[:, None]
    indices = jnp.arange(0, dimension, 2)
    denom = 1000.0 ** (indices // dimension)
    pe = jnp.zeros((seq_length, dimension), dtype=jnp.float32)
    pe = pe.at[:, 0::2].set(jnp.sin(positions / denom))
    pe = pe.at[:, 1::2].set(jnp.cos(positions / denom))
    return pe


def transformer_forward(params, input_seq, output_seq, *, num_heads, x_pad, y_pad):
    B, S_enc = input_seq.shape
    _, S_dec = output_seq.shape

    # per-batch key-validity rows only; padding/causal (Sq,Sk) masks are built
    # inside the attention kernels (no (B,Sq,Sk) mask ever materialized in HBM).
    enc_valid = (input_seq != x_pad).astype(jnp.float32).reshape(B, 1, S_enc)
    dec_valid = (output_seq != y_pad).astype(jnp.float32).reshape(B, 1, S_dec)

    # TODO(synk): dropout in the reference is identity at inference; omitted.
    # TODO(synk): token-embedding gather kept in plain JAX (no gather kernel needed).

    # -------- encoder --------
    x = (params["enc_tok_emb"][input_seq] + params["enc_pos_emb"][:S_enc]
         ).astype(jnp.bfloat16)
    for lp in params["encoder_layers"]:
        x = self_attention_block(lp["mha"], lp["ln1"], x, enc_valid,
                                 num_heads, causal=False)
        x = ffn_residual_layernorm(x, lp["ffn"], lp["ln2"])
    enc_out = x

    # -------- decoder --------
    y = (params["dec_tok_emb"][output_seq] + params["dec_pos_emb"][:S_dec]
         ).astype(jnp.bfloat16)
    for lp in params["decoder_layers"]:
        y1 = self_attention_block(lp["self_mha"], lp["ln1"], y, dec_valid,
                                  num_heads, causal=True)
        y2 = cross_attention_block(lp["cross_mha"], lp["ln2"], y1, enc_out,
                                   enc_valid, num_heads)
        y = ffn_residual_layernorm(y2, lp["ffn"], lp["ln3"])

    # final vocab projection fused with the masked softmax
    Bd, Sd, Dd = y.shape
    dec_vocab = params["dec_vocab"]
    probs = project_softmax(y.reshape(Bd * Sd, Dd),
                            params["proj_w"], params["proj_b"], dec_vocab)
    return probs[:, :dec_vocab].reshape(Bd, Sd, dec_vocab)


# ----------------------------- parameter init -------------------------------

def _dense(key, fan_in, fan_out):
    # weights stored bf16 (MXU-native, halves weight DMA bytes); bias stays f32
    w = (jax.random.normal(key, (fan_in, fan_out), dtype=jnp.float32) * 0.02
         ).astype(jnp.bfloat16)
    b = jnp.zeros((fan_out,), dtype=jnp.float32)
    return w, b


def _mha_self_params(key, d):
    ks = jax.random.split(key, 4)
    wq, bq = _dense(ks[0], d, d)
    wk, bk = _dense(ks[1], d, d)
    wv, bv = _dense(ks[2], d, d)
    wo, bo = _dense(ks[3], d, d)
    return dict(wqkv=jnp.concatenate([wq, wk, wv], axis=1),
                bqkv=jnp.concatenate([bq, bk, bv]),
                wo=wo, bo=bo)


def _mha_cross_params(key, d):
    ks = jax.random.split(key, 4)
    wq, bq = _dense(ks[0], d, d)
    wk, bk = _dense(ks[1], d, d)
    wv, bv = _dense(ks[2], d, d)
    wo, bo = _dense(ks[3], d, d)
    return dict(wq=wq, bq=bq,
                wkv=jnp.concatenate([wk, wv], axis=1),
                bkv=jnp.concatenate([bk, bv]),
                wo=wo, bo=bo)


def _ffn_params(key, d, hidden):
    k1, k2 = jax.random.split(key)
    w1, b1 = _dense(k1, d, hidden)
    w2, b2 = _dense(k2, hidden, d)
    return dict(w1=w1, b1=b1, w2=w2, b2=b2)


def _ln_params(d):
    return dict(gamma=jnp.ones((d,), jnp.float32), beta=jnp.zeros((d,), jnp.float32))


def init_params(key, *, d_model, hidden, num_heads, enc_vocab, dec_vocab,
                enc_max_seq, dec_max_seq, n_enc_layers, n_dec_layers):
    keys = jax.random.split(key, 4 + n_enc_layers + n_dec_layers)
    params = dict(
        enc_tok_emb=jax.random.normal(keys[0], (enc_vocab, d_model), jnp.float32) * 0.02,
        dec_tok_emb=jax.random.normal(keys[1], (dec_vocab, d_model), jnp.float32) * 0.02,
        enc_pos_emb=positional_embeddings(enc_max_seq, d_model),
        dec_pos_emb=positional_embeddings(dec_max_seq, d_model),
        encoder_layers=[],
        decoder_layers=[],
    )
    for i in range(n_enc_layers):
        k1, k2 = jax.random.split(keys[4 + i])
        params["encoder_layers"].append(dict(
            mha=_mha_self_params(k1, d_model),
            ffn=_ffn_params(k2, d_model, hidden),
            ln1=_ln_params(d_model),
            ln2=_ln_params(d_model),
        ))
    for i in range(n_dec_layers):
        k1, k2, k3 = jax.random.split(keys[4 + n_enc_layers + i], 3)
        params["decoder_layers"].append(dict(
            self_mha=_mha_self_params(k1, d_model),
            cross_mha=_mha_cross_params(k2, d_model),
            ffn=_ffn_params(k3, d_model, hidden),
            ln1=_ln_params(d_model),
            ln2=_ln_params(d_model),
            ln3=_ln_params(d_model),
        ))
    # final projection, padded along N to a multiple of 128 (lane-dense stores)
    pw, pb = _dense(keys[2], d_model, dec_vocab)
    vocab_pad = ((dec_vocab + 127) // 128) * 128
    params["proj_w"] = jnp.zeros((d_model, vocab_pad), jnp.bfloat16).at[:, :dec_vocab].set(pw)
    params["proj_b"] = jnp.zeros((vocab_pad,), jnp.float32).at[:dec_vocab].set(pb)
    params["dec_vocab"] = dec_vocab
    return params


# ---------------------------------- main ------------------------------------

if __name__ == "__main__":
    B = 2
    S = 8
    D_MODEL = 32
    HEADS = 4
    HIDDEN = 64
    ENC_VOCAB = 50
    DEC_VOCAB = 40
    N_ENC = 2
    N_DEC = 2
    X_PAD = 0
    Y_PAD = 0

    root = jax.random.PRNGKey(0)
    kp, kx, ky = jax.random.split(root, 3)

    params = init_params(
        kp, d_model=D_MODEL, hidden=HIDDEN, num_heads=HEADS,
        enc_vocab=ENC_VOCAB, dec_vocab=DEC_VOCAB,
        enc_max_seq=S, dec_max_seq=S,
        n_enc_layers=N_ENC, n_dec_layers=N_DEC)

    input_sequence = jax.random.randint(kx, (B, S), 1, ENC_VOCAB, dtype=jnp.int32)
    output_sequence = jax.random.randint(ky, (B, S), 1, DEC_VOCAB, dtype=jnp.int32)
    # make the mask path non-trivial: pad the tail of each sequence
    input_sequence = input_sequence.at[:, -2:].set(X_PAD)
    output_sequence = output_sequence.at[:, -1:].set(Y_PAD)

    out = transformer_forward(params, input_sequence, output_sequence,
                              num_heads=HEADS, x_pad=X_PAD, y_pad=Y_PAD)
    out = jax.block_until_ready(out)

    assert out.shape == (B, S, DEC_VOCAB), out.shape
    assert bool(jnp.all(jnp.isfinite(out)))
    # each row is a softmax distribution over the decoder vocabulary
    assert bool(jnp.allclose(jnp.sum(out, axis=-1), 1.0, atol=1e-3))
    print("KERNEL_OK")
</pallas_src>

<mosaic_0001>
module attributes {stable_mosaic.version = 11 : i64} {
  func.func @_linear_kernel(%arg0: i32, %arg1: i32, %arg2: i32, %arg3: memref<16x32xbf16, #tpu.memory_space<vmem>>, %arg4: memref<32x96xbf16, #tpu.memory_space<vmem>>, %arg5: memref<1x96xf32, #tpu.memory_space<vmem>>, %arg6: memref<16x96xbf16, #tpu.memory_space<vmem>>, %arg7: memref<16x96xf32, #tpu.memory_space<vmem>>) attributes {dimension_semantics = [#tpu.dimension_semantics<parallel>, #tpu.dimension_semantics<parallel>, #tpu.dimension_semantics<arbitrary>], iteration_bounds = array<i64: 1, 1, 1>, scalar_prefetch = 0 : i64, scratch_operands = 1 : i64, tpu.core_type = #tpu.core_type<tc>, window_params = [{transform_indices = @transform_0, window_bounds = array<i64: 16, 32>}, {transform_indices = @transform_1, window_bounds = array<i64: 32, 96>}, {transform_indices = @transform_2, window_bounds = array<i64: 1, 96>}, {transform_indices = @transform_3, window_bounds = array<i64: 16, 96>}]} {
    %c0_i32 = arith.constant 0 : i32
    %0 = arith.cmpi eq, %arg2, %c0_i32 : i32
    %1 = arith.extui %0 : i1 to i32
    %c0_i32_0 = arith.constant 0 : i32
    %2 = arith.cmpi ne, %1, %c0_i32_0 : i32
    scf.if %2 {
      %cst_10 = arith.constant 0.000000e+00 : f32
      %12 = vector.broadcast %cst_10 : f32 to vector<16x96xf32>
      %c0_11 = arith.constant 0 : index
      %c0_12 = arith.constant 0 : index
      %13 = vector.load %arg7[%c0_11, %c0_12] : memref<16x96xf32, #tpu.memory_space<vmem>>, vector<16x96xf32>
      tpu.vector_store %arg7[%c0_11, %c0_12], %12 {strides = array<i32>} : memref<16x96xf32, #tpu.memory_space<vmem>>, vector<16x96xf32>,
    } else {
    }
    %c0 = arith.constant 0 : index
    %c0_1 = arith.constant 0 : index
    %3 = vector.load %arg7[%c0, %c0_1] : memref<16x96xf32, #tpu.memory_space<vmem>>, vector<16x96xf32>
    %c0_2 = arith.constant 0 : index
    %c0_3 = arith.constant 0 : index
    %4 = vector.load %arg3[%c0_2, %c0_3] : memref<16x32xbf16, #tpu.memory_space<vmem>>, vector<16x32xbf16>
    %c0_4 = arith.constant 0 : index
    %c0_5 = arith.constant 0 : index
    %5 = vector.load %arg4[%c0_4, %c0_5] : memref<32x96xbf16, #tpu.memory_space<vmem>>, vector<32x96xbf16>
    %cst = arith.constant dense<0.000000e+00> : vector<16x96xf32>
    %6 = tpu.matmul %4, %5, %cst {dimension_numbers = #tpu.dot_dimension_numbers<[1], [0], [0], [1], [0, 0, 1, 1], [], []>} : vector<16x32xbf16>, vector<32x96xbf16>, vector<16x96xf32> -> vector<16x96xf32>
    %7 = arith.addf %3, %6 : vector<16x96xf32>
    %c0_6 = arith.constant 0 : index
    %c0_7 = arith.constant 0 : index
    %8 = vector.load %arg7[%c0_6, %c0_7] : memref<16x96xf32, #tpu.memory_space<vmem>>, vector<16x96xf32>
    tpu.vector_store %arg7[%c0_6, %c0_7], %7 {strides = array<i32>} : memref<16x96xf32, #tpu.memory_space<vmem>>, vector<16x96xf32>,
    %c0_i32_8 = arith.constant 0 : i32
    %9 = arith.cmpi eq, %arg2, %c0_i32_8 : i32
    %10 = arith.extui %9 : i1 to i32
    %c0_i32_9 = arith.constant 0 : i32
    %11 = arith.cmpi ne, %10, %c0_i32_9 : i32
    scf.if %11 {
      %c0_10 = arith.constant 0 : index
      %c0_11 = arith.constant 0 : index
      %12 = vector.load %arg7[%c0_10, %c0_11] : memref<16x96xf32, #tpu.memory_space<vmem>>, vector<16x96xf32>
      %c0_12 = arith.constant 0 : index
      %c0_13 = arith.constant 0 : index
      %13 = vector.load %arg5[%c0_12, %c0_13] : memref<1x96xf32, #tpu.memory_space<vmem>>, vector<1x96xf32>
      %14 = vector.broadcast %13 : vector<1x96xf32> to vector<16x96xf32>
      %15 = arith.addf %12, %14 : vector<16x96xf32>
      %16 = arith.truncf %15 : vector<16x96xf32> to vector<16x96xbf16>
      %c0_14 = arith.constant 0 : index
      %c0_15 = arith.constant 0 : index
      %17 = vector.load %arg6[%c0_14, %c0_15] : memref<16x96xbf16, #tpu.memory_space<vmem>>, vector<16x96xbf16>
      tpu.vector_store %arg6[%c0_14, %c0_15], %16 {strides = array<i32>} : memref<16x96xbf16, #tpu.memory_space<vmem>>, vector<16x96xbf16>,
    } else {
    }
    return
  }
  func.func @transform_0(%arg0: i32, %arg1: i32, %arg2: i32) -> (i32, i32) {
    %c0_i32 = arith.constant 0 : i32
    return %arg0, %arg2 : i32, i32
  }
  func.func @transform_1(%arg0: i32, %arg1: i32, %arg2: i32) -> (i32, i32) {
    %c0_i32 = arith.constant 0 : i32
    return %arg2, %arg1 : i32, i32
  }
  func.func @transform_2(%arg0: i32, %arg1: i32, %arg2: i32) -> (i32, i32) {
    %c0_i32 = arith.constant 0 : i32
    %c0_i32_0 = arith.constant 0 : i32
    return %c0_i32, %arg1 : i32, i32
  }
  func.func @transform_3(%arg0: i32, %arg1: i32, %arg2: i32) -> (i32, i32) {
    %c0_i32 = arith.constant 0 : i32
    return %arg0, %arg1 : i32, i32
  }
}

</mosaic_0001>

<llo_original>
// kernel: tpu_custom_call.1
$region0: #{tpu_custom_call.1}
  #allocation0 [shape = 'u32[]', space=smem, size = 0x4, offset = 0x4, fixed_abs, tag = 'smem constant byte address 0x4 - core index']
  #allocation1 [shape = 'u32[144,128]{1,0:T(1,128)}', space=vmem, size = 0x12000, scoped, tag = 'internal scratch']
  #allocation2 [shape = 'f32[16,96]{1,0:T(8,128)}', space=vmem, size = 0x2000, scoped, tag = 'scratch operand']
  %s0 = inlined_call_operand.hbm [shape: bf16[16,32], index: 0, kind: input, shape index: {}]
  %s1 = inlined_call_operand.hbm [shape: bf16[32,96], index: 1, kind: input, shape index: {}]
  %s2 = inlined_call_operand.vmem [shape: f32[1,96], index: 2, kind: input, shape index: {}]
  %s3 = inlined_call_operand.hbm [shape: bf16[16,96], index: 3, kind: output, shape index: {}]
  %s4 = sld [smem:[#allocation0]]
  $region38: #{tpu_custom_call.1} parent=0
    _
  %s6 = ssub.s32 1, %s4
  %s7 = scalar_select 0, %s6, %s4
  $region1: #{tpu_custom_call.1} parent=0
    #allocation3 [shape = 'u8[4096]{0}', space=vmem, size = 0x1000, scoped, tag = 'input window, operand 0, single buffered']
    #allocation4 [shape = 's32[1]{0}', space=sflag, size = 0x4, scoped, tag = 'scoped memory for tpu_custom_call.1']
    #allocation5 [shape = 's32[1]{0}', space=sflag, size = 0x4, scoped, tag = 'scoped memory for tpu_custom_call.1']
    #allocation6 [shape = 'u8[8192]{0}', space=vmem, size = 0x2000, scoped, tag = 'input window, operand 1, single buffered']
    #allocation7 [shape = 's32[1]{0}', space=sflag, size = 0x4, scoped, tag = 'scoped memory for tpu_custom_call.1']
    #allocation8 [shape = 'u8[4096]{0}', space=vmem, size = 0x1000, scoped, tag = 'output window, operand 0, single buffered']
    %8 = vsyncpa [#allocation4], 0
    %9 = vsyncpa [#allocation7], 0
    %10 = vsyncpa [#allocation5], 0
    // Predicated region
    $region2: #{tpu_custom_call.1} parent=1 // pred_check
      _
    $region3: #{tpu_custom_call.1} parent=1 // pred_check_branch
      %12 = sbr.rel (0) target = $region5
    $region4: #{tpu_custom_call.1} parent=1 // pred_region
      %s14 = ssub.s32 128, 128
      %15 = vsyncadd [#allocation4], %s14
      %s16 = sshll.u32 [#allocation3], 4
      %s17 = int_to_ptr.vmem [resolvable:$true] %s16
      %22 = dma.hbm_to_vmem [thread:$0]  %s0, 128, %s17, [#allocation4], 64, 64, 4
    $region5: #{tpu_custom_call.1} parent=1 // pred_fallthru
      _
    // Predicated region
    $region6: #{tpu_custom_call.1} parent=1 // pred_check
      _
    $region7: #{tpu_custom_call.1} parent=1 // pred_check_branch
      %24 = sbr.rel (0) target = $region9
    $region8: #{tpu_custom_call.1} parent=1 // pred_region
      %s26 = ssub.s32 256, 256
      %27 = vsyncadd [#allocation7], %s26
      %s28 = sshll.u32 [#allocation6], 4
      %s29 = int_to_ptr.vmem [resolvable:$true] %s28
      %34 = dma.hbm_to_vmem [thread:$0]  %s1, 256, %s29, [#allocation7], 64, 64, 4
    $region9: #{tpu_custom_call.1} parent=1 // pred_fallthru
      _
    // Predicated region
    $region10: #{tpu_custom_call.1} parent=1 // pred_check
      _
    $region11: #{tpu_custom_call.1} parent=1 // pred_check_branch
      %36 = sbr.rel (0) target = $region13
    $region12: #{tpu_custom_call.1} parent=1 // pred_region
      _
    $region13: #{tpu_custom_call.1} parent=1 // pred_fallthru
      _
    // Predicated region
    $region14: #{tpu_custom_call.1} parent=1 // pred_check
      _
    $region15: #{tpu_custom_call.1} parent=1 // pred_check_branch
      %38 = sbr.rel (0) target = $region17
    $region16: #{tpu_custom_call.1} parent=1 // pred_region
      %39 = dma.done [#allocation4], 128
    $region17: #{tpu_custom_call.1} parent=1 // pred_fallthru
      _
    // Predicated region
    $region18: #{tpu_custom_call.1} parent=1 // pred_check
      _
    $region19: #{tpu_custom_call.1} parent=1 // pred_check_branch
      %41 = sbr.rel (0) target = $region21
    $region20: #{tpu_custom_call.1} parent=1 // pred_region
      %42 = dma.done [#allocation7], 256
    $region21: #{tpu_custom_call.1} parent=1 // pred_fallthru
      _
    %p44 = scmp.eq.s32.totalorder 0, 0
    // Predicated region
    $region22: #{tpu_custom_call.1} parent=1 // pred_check
      %p45 = pneg %p44
    $region23: #{tpu_custom_call.1} parent=1 // pred_check_branch
      %47 = sbr.rel (%p45) target = $region25
    $region24: #{tpu_custom_call.1} parent=1 // pred_region
      %vm48 = vcmask 785408
      %49 = vst.msk [vmem:[#allocation2] sm:$0xff] %vm48, 0.0
      %50 = vst.msk [vmem:[#allocation2 + $0x8] sm:$0xff] %vm48, 0.0
    $region25: #{tpu_custom_call.1} parent=1 // pred_fallthru
      _
    %v51 = vld [vmem:[#allocation2] sm:$0xff]
    %v52 = vld [vmem:[#allocation2 + $0x8] sm:$0xff]
    %v53 = vld [vmem:[#allocation3] sm:$0xf]
    %v54 = vld [vmem:[#allocation3 + $0x4] sm:$0xf]
    %v55 = vld [vmem:[#allocation6] sm:$0xf]
    %v56 = vld [vmem:[#allocation6 + $0x4] sm:$0xf]
    %v57 = vld [vmem:[#allocation6 + $0x8] sm:$0xf]
    %v58 = vld [vmem:[#allocation6 + $0xc] sm:$0xf]
    %v61 = vunpack.c.l.b16 %v53
    %v62 = vunpack.c.l.b16 %v54
    %v63 = vpack.c.b16 %v62, %v61
    %v68 = vunpack.c.l.b16 %v55
    %v69 = vunpack.c.l.b16 %v56
    %v70 = vunpack.c.l.b16 %v57
    %v71 = vunpack.c.l.b16 %v58
    %v72 = vpack.c.b16 %v69, %v68
    %v73 = vpack.c.b16 %v71, %v70
    %vm76 = vcmask 261120
    %v78 = vsel %vm76, %v63, 0
    %80 = vmatprep.subr.bf16.mxu0 0
    %81 = vmatpush1.bf16.msra.mxu0 %v72
    %82 = vmatprep.subr.bf16.mxu0 0
    %83 = vmatpush1.bf16.msra.mxu0 %v73
    %84 = vmatprep.subr.bf16.mxu0 0
    %85 = vmatpush1.bf16.msra.mxu0 0
    %86 = vmatprep.subr.bf16.mxu0 0
    %87 = vmatpush1.bf16.msra.mxu0 0
    %88 = vmatprep.subr.bf16.mxu0 0
    %89 = vmatpush1.bf16.msra.mxu0 0
    %90 = vmatprep.subr.bf16.mxu0 0
    %91 = vmatpush1.bf16.msra.mxu0 0
    %92 = vmatprep.subr.bf16.mxu0 0
    %93 = vmatpush1.bf16.msra.mxu0 0
    %94 = vmatprep.subr.bf16.mxu0 0
    %95 = vmatpush1.bf16.msra.mxu0 0
    %96 = vmatprep.subr.bf16.mxu0 0
    %97 = vmatpush1.bf16.msra.mxu0 0
    %98 = vmatprep.subr.bf16.mxu0 0
    %99 = vmatpush1.bf16.msra.mxu0 0
    %100 = vmatprep.subr.bf16.mxu0 0
    %101 = vmatpush1.bf16.msra.mxu0 0
    %102 = vmatprep.subr.bf16.mxu0 0
    %103 = vmatpush1.bf16.msra.mxu0 0
    %104 = vmatprep.subr.bf16.mxu0 0
    %105 = vmatpush1.bf16.msra.mxu0 0
    %106 = vmatprep.subr.bf16.mxu0 0
    %107 = vmatpush1.bf16.msra.mxu0 0
    %108 = vmatprep.subr.bf16.mxu0 0
    %109 = vmatpush1.bf16.msra.mxu0 0
    %110 = vmatprep.subr.bf16.mxu0 0
    %111 = vmatpush1.bf16.msra.mxu0 0
    %112 = vmatprep.mubr.bf16.mxu0 0
    %113 = vmatmul.mubr.bf16.gmra.mrb[0].mxu0 %v78
    %v114 = vpop.f32.mrb[0].mxu0
    %v115 = vadd.f32 0.0, %v114
    %v116 = vpop.f32.mrb[0].mxu0
    %v117 = vpop.f32.mrb[0].mxu0
    %v118 = vadd.f32 0.0, %v117
    %v119 = vpop.f32.mrb[0].mxu0
    %120 = vdwg.mxu0
    %v121 = vadd.f32 %v51, %v115
    %v122 = vadd.f32 %v52, %v118
    %vm123 = vcmask 785408
    %124 = vst.msk [vmem:[#allocation2] sm:$0xff] %vm123, %v121
    %125 = vst.msk [vmem:[#allocation2 + $0x8] sm:$0xff] %vm123, %v122
    // Predicated region
    $region26: #{tpu_custom_call.1} parent=1 // pred_check
      %p126 = pneg %p44
    $region27: #{tpu_custom_call.1} parent=1 // pred_check_branch
      %128 = sbr.rel (%p126) target = $region29
    $region28: #{tpu_custom_call.1} parent=1 // pred_region
      %v129 = vld [vmem:[#allocation2] sm:$0xff]
      %v130 = vld [vmem:[#allocation2 + $0x8] sm:$0xff]
      %v131 = vld [vmem:[%s2] sm:$0x1]
      %v133 = vlaneseq
      %v134 = vshrl.u32 %v133, 7
      %v135 = vsub.s32 0, %v134
      %v136 = vrot.slane %v131, %v135
      %v138 = vadd.f32 %v129, %v136
      %v139 = vadd.f32 %v130, %v136
      %v140 = vpack.c.bf16 %v139, %v138
      %v142 = vunpack.c.l.b16 %v140
      %v143 = vunpack.c.h.b16 %v140
      %v144 = vpack.c.b16 %v142, %v142
      %v145 = vpack.c.b16 %v143, %v143
      %vm148 = vcmask 781312
      %149 = vst.msk [vmem:[#allocation8] sm:$0xf] %vm148, %v144
      %150 = vst.msk [vmem:[#allocation8 + $0x4] sm:$0xf] %vm148, %v145
    $region29: #{tpu_custom_call.1} parent=1 // pred_fallthru
      _
    // Predicated region
    $region30: #{tpu_custom_call.1} parent=1 // pred_check
      _
    $region31: #{tpu_custom_call.1} parent=1 // pred_check_branch
      %152 = sbr.rel (0) target = $region33
    $region32: #{tpu_custom_call.1} parent=1 // pred_region
      %s154 = ssub.s32 128, 128
      %155 = vsyncadd [#allocation5], %s154
      %s156 = sshll.u32 [#allocation8], 4
      %s157 = int_to_ptr.vmem [resolvable:$true] %s156
      %162 = dma.vmem_to_hbm [thread:$0]  %s157, 128, %s3, [#allocation5], 64, 64, 4
    $region33: #{tpu_custom_call.1} parent=1 // pred_fallthru
      _
    // Predicated region
    $region34: #{tpu_custom_call.1} parent=1 // pred_check
      _
    $region35: #{tpu_custom_call.1} parent=1 // pred_check_branch
      %164 = sbr.rel (0) target = $region37
    $region36: #{tpu_custom_call.1} parent=1 // pred_region
      %165 = dma.done [#allocation5], 128
    $region37: #{tpu_custom_call.1} parent=1 // pred_fallthru
      _
    %166 = vsyncpa [#allocation4], 1
    %167 = vsyncpa [#allocation7], 1
    %168 = vsyncpa [#allocation5], 1

</llo_original>
